<compile_context>
chip_gen: v7x
topology: tpu7x:2x2x1
jax: 0.10.0
libtpu: 0.0.40
codegen_flags: <defaults>
</compile_context>

<pallas_src>
import jax
import jax.numpy as jnp
from jax import lax
from jax.experimental import pallas as pl
from jax.experimental.pallas import tpu as pltpu

ATTN_DIM = 512  # fixed by nn.Linear(hidden_size, 512) in the module


# ---------------------------------------------------------------------------
# sizing helpers
# ---------------------------------------------------------------------------
def _vmem_limit_bytes():
    """~75% of per-core VMEM (leave headroom for Mosaic scratch / spill slots)."""
    cap = 64 * 1024 * 1024  # conservative default = v7x per-TC VMEM
    try:
        info = pltpu.get_tpu_info()
        cap = int(getattr(info, "vmem_capacity_bytes", cap))
    except Exception:
        pass
    return (cap * 3) // 4


def _derive_block_b(S, H, itemsize, vmem_limit_bytes):
    """Batch tile so 2x double-buffered x tiles fit ~1/3 of the VMEM budget."""
    per_seq = max(1, S * H * itemsize)
    bt = (vmem_limit_bytes // 3) // (2 * per_seq)
    if bt >= 32:
        return 32
    if bt >= 8:
        return (int(bt) // 8) * 8
    return 8


def _pick_s_chunk(S, Bt, target_rows=512, min_rows=256):
    """Largest divisor of S whose flattened chunk (Bt * Sc rows) is ~256-512 rows."""
    if Bt * S <= target_rows:
        return S
    cands = [d for d in range(1, S) if S % d == 0 and min_rows <= Bt * d <= target_rows]
    return max(cands) if cands else S


# ---------------------------------------------------------------------------
# kernel
# ---------------------------------------------------------------------------
def _classifier_head_kernel(x_ref, w1_ref, b1_ref, w2_ref, wfc_ref, bfc_ref,
                            logits_ref):
    Bt, S, H = x_ref.shape
    A = w1_ref.shape[1]
    Cp = wfc_ref.shape[1]

    s_chunk = _pick_s_chunk(S, Bt)
    n_chunks = S // s_chunk

    w2_row = w2_ref[...].reshape(1, 1, A)   # (1,1,512) f32
    b1_row = b1_ref[...]                    # (1,512)   f32

    def process_chunk(s0, m, l, acc):
        # (Bt, Sc, H) slice of the resident x block, flattened to a tall-M matmul operand.
        xc2 = x_ref[:, pl.ds(s0, s_chunk), :].reshape(Bt * s_chunk, H)

        # attention scorer: Linear(H,512) -> Tanh   (MXU, f32 accumulation)
        # NOTE: tanh kept in f32 for numerics; on v6e/v7x it could run in bf16 (~2x EUP).
        h = jnp.tanh(
            jnp.dot(xc2, w1_ref[...], preferred_element_type=jnp.float32) + b1_row)

        # Linear(512,1) as a VPU multiply + XLU lane reduce -> lane-dense (Bt, Sc) scores
        # (avoids an N=1 MXU matmul and the (M,1) lane-sparse layout). The Linear bias b2
        # shifts every score equally and cancels in Softmax(dim=1), so it is omitted.
        scores = jnp.sum(h.reshape(Bt, s_chunk, A) * w2_row, axis=-1)   # (Bt, Sc) f32

        # fused fc: y = x @ Wfc (lane-dense N = Cp); pooled @ Wfc == sum_s softmax_s * y_s.
        y = jnp.dot(xc2, wfc_ref[...],
                    preferred_element_type=jnp.float32).reshape(Bt, s_chunk, Cp)

        # online softmax over the sequence dim (lane axis); softmax weights stay f32.
        m_new = jnp.maximum(m, jnp.max(scores, axis=-1, keepdims=True))  # (Bt, 1)
        alpha = jnp.exp(m - m_new)
        p = jnp.exp(scores - m_new)                                      # (Bt, Sc)
        l_new = alpha * l + jnp.sum(p, axis=-1, keepdims=True)
        # weighted pooling of y: VPU multiply + sublane reduce (MXU stays on W1/Wfc).
        acc_new = alpha * acc + jnp.sum(p[:, :, None] * y, axis=1)       # (Bt, Cp)
        return m_new, l_new, acc_new

    m0 = jnp.full((Bt, 1), -jnp.inf, dtype=jnp.float32)
    l0 = jnp.zeros((Bt, 1), dtype=jnp.float32)
    acc0 = jnp.zeros((Bt, Cp), dtype=jnp.float32)

    if n_chunks == 1:
        m, l, acc = process_chunk(0, m0, l0, acc0)
    else:
        def body(c, carry):
            s0 = pl.multiple_of(c * s_chunk, s_chunk)
            return process_chunk(s0, *carry)
        m, l, acc = lax.fori_loop(0, n_chunks, body, (m0, l0, acc0),
                                  unroll=n_chunks <= 8)

    # exact softmax normalization (no approx reciprocal) + fc bias; lane-dense (Bt, Cp) store.
    logits = acc / l + bfc_ref[...]
    logits_ref[...] = logits.astype(logits_ref.dtype)


# ---------------------------------------------------------------------------
# wrapper
# ---------------------------------------------------------------------------
def classifier_head(x, w1, b1, w2, b2, wfc, bfc, *,
                    compute_dtype=jnp.bfloat16, block_b=None):
    """Head of ClassifierModel.forward.

    x: (B, S, H) sequence_output. Weights in (in_features, out_features) layout.
    compute_dtype: dtype of the MXU operands (x / W1 / Wfc); accumulation stays f32.
    Returns logits (B, C) float32.
    """
    B, S, H = x.shape
    C = wfc.shape[1]
    A = w1.shape[1]

    vmem_limit = _vmem_limit_bytes()
    cdt = jnp.dtype(compute_dtype)
    if block_b is None:
        block_b = _derive_block_b(S, H, cdt.itemsize, vmem_limit)

    # Batch tile. Multiple of 8 (output-block sublane rule) and >= 2 grid steps whenever
    # B allows, so the "parallel" axis can feed megacore / both v7x TensorCores.
    if B <= 8:
        Bt = B
    else:
        Bt = min(block_b, max(8, (pl.cdiv(B, 2) // 8) * 8))
    Bp = pl.cdiv(B, Bt) * Bt

    # MXU operands in compute_dtype (bf16 by default); biases / scorer row stay f32.
    x_c = x.astype(cdt)
    if Bp != B:
        x_c = jnp.pad(x_c, ((0, Bp - B), (0, 0), (0, 0)))
    w1_c = w1.astype(cdt)

    # Lane-dense logits store: pad class dim to a multiple of 128, slice after.
    Cp = pl.cdiv(C, 128) * 128
    wfc_c = jnp.pad(wfc, ((0, 0), (0, Cp - C))).astype(cdt)
    bfc_p = jnp.pad(bfc.reshape(1, C).astype(jnp.float32), ((0, 0), (0, Cp - C)))

    b1_r = b1.reshape(1, A).astype(jnp.float32)
    w2_r = w2.reshape(1, A).astype(jnp.float32)   # row form for the VPU/XLU contraction
    del b2  # Softmax(dim=1) is shift-invariant: the Linear(512,1) bias cancels exactly.

    def _run(single_buffer_weights):
        def w_spec(shape):
            idx = lambda b, _n=len(shape): (0,) * _n
            if single_buffer_weights:
                # constant index_map -> double-buffering buys nothing; halve their VMEM.
                return pl.BlockSpec(shape, idx, pipeline_mode=pl.Buffered(1))
            return pl.BlockSpec(shape, idx)

        return pl.pallas_call(
            _classifier_head_kernel,
            out_shape=jax.ShapeDtypeStruct((Bp, Cp), jnp.float32),
            grid_spec=pltpu.PrefetchScalarGridSpec(
                num_scalar_prefetch=0,
                grid=(Bp // Bt,),
                in_specs=[
                    pl.BlockSpec((Bt, S, H), lambda b: (b, 0, 0)),   # x batch tile
                    w_spec((H, A)),                                   # W1  (resident)
                    w_spec((1, A)),                                   # b1
                    w_spec((1, A)),                                   # W2 (as a row)
                    w_spec((H, Cp)),                                  # Wfc (padded C)
                    w_spec((1, Cp)),                                  # bfc (padded C)
                ],
                out_specs=pl.BlockSpec((Bt, Cp), lambda b: (b, 0)),
            ),
            compiler_params=pltpu.CompilerParams(
                dimension_semantics=("parallel",),
                vmem_limit_bytes=vmem_limit),
        )(x_c, w1_c, b1_r, w2_r, wfc_c, bfc_p)

    try:
        out = _run(True)
    except Exception:
        # fallback for jax versions / backends without pipeline_mode=pl.Buffered support
        out = _run(False)

    return out[:B, :C]


# ---------------------------------------------------------------------------
# reference + test
# ---------------------------------------------------------------------------
def _reference(x, w1, b1, w2, b2, wfc, bfc):
    hi = jax.lax.Precision.HIGHEST
    h = jnp.tanh(jnp.einsum("bsh,hd->bsd", x, w1, precision=hi) + b1)
    scores = jnp.einsum("bsd,do->bso", h, w2, precision=hi) + b2
    weights = jax.nn.softmax(scores, axis=1)
    pooled = jnp.sum(weights * x, axis=1)
    return jnp.dot(pooled, wfc, precision=hi) + bfc


if __name__ == "__main__":
    S, H, C = 8, 32, 4
    INIT_RANGE = 0.02  # config.initializer_range

    key = jax.random.PRNGKey(0)
    kx1, kx2, k1, k2, k3, k4 = jax.random.split(key, 6)

    # attention linears: normal(0, initializer_range), zero bias (per _init_weights)
    w1 = INIT_RANGE * jax.random.normal(k1, (H, ATTN_DIM), dtype=jnp.float32)
    b1 = jnp.zeros((ATTN_DIM,), dtype=jnp.float32)
    w2 = INIT_RANGE * jax.random.normal(k2, (ATTN_DIM, 1), dtype=jnp.float32)
    b2 = jnp.zeros((1,), dtype=jnp.float32)

    # fc: PyTorch default Linear init ~ U(-1/sqrt(H), 1/sqrt(H))
    bound = 1.0 / (H ** 0.5)
    wfc = jax.random.uniform(k3, (H, C), minval=-bound, maxval=bound, dtype=jnp.float32)
    bfc = jax.random.uniform(k4, (C,), minval=-bound, maxval=bound, dtype=jnp.float32)

    # Check both the single-tile path (B <= 8) and the multi-step + padded path (B = 10).
    for B, kx in ((2, kx1), (10, kx2)):
        x = jax.random.normal(kx, (B, S, H), dtype=jnp.float32)
        ref = _reference(x, w1, b1, w2, b2, wfc, bfc)

        # tight-tolerance f32 path (per review: keep a tight f32 reference path)
        lg32 = classifier_head(x, w1, b1, w2, b2, wfc, bfc, compute_dtype=jnp.float32)
        jax.block_until_ready(lg32)
        assert lg32.shape == (B, C)
        assert jnp.allclose(lg32, ref, atol=1e-4, rtol=1e-4)

        # production path: bf16 MXU operands, f32 accumulation / softmax weights
        lgbf = classifier_head(x, w1, b1, w2, b2, wfc, bfc, compute_dtype=jnp.bfloat16)
        jax.block_until_ready(lgbf)
        assert lgbf.shape == (B, C)
        assert jnp.allclose(lgbf, ref, atol=2e-2, rtol=2e-2)

    print("KERNEL_OK")
</pallas_src>

<mosaic_0001>
module attributes {stable_mosaic.version = 11 : i64} {
  func.func @_classifier_head_kernel(%arg0: i32, %arg1: memref<2x8x32xf32, #tpu.memory_space<vmem>>, %arg2: memref<32x512xf32, #tpu.memory_space<vmem>>, %arg3: memref<1x512xf32, #tpu.memory_space<vmem>>, %arg4: memref<1x512xf32, #tpu.memory_space<vmem>>, %arg5: memref<32x128xf32, #tpu.memory_space<vmem>>, %arg6: memref<1x128xf32, #tpu.memory_space<vmem>>, %arg7: memref<2x128xf32, #tpu.memory_space<vmem>>) attributes {dimension_semantics = [#tpu.dimension_semantics<parallel>], iteration_bounds = array<i64: 1>, scalar_prefetch = 0 : i64, scratch_operands = 0 : i64, tpu.core_type = #tpu.core_type<tc>, window_params = [{transform_indices = @transform_0, window_bounds = array<i64: 2, 8, 32>}, {pipeline_mode = #tpu.pipeline_mode<synchronous>, transform_indices = @transform_1, window_bounds = array<i64: 32, 512>}, {pipeline_mode = #tpu.pipeline_mode<synchronous>, transform_indices = @transform_2, window_bounds = array<i64: 1, 512>}, {pipeline_mode = #tpu.pipeline_mode<synchronous>, transform_indices = @transform_3, window_bounds = array<i64: 1, 512>}, {pipeline_mode = #tpu.pipeline_mode<synchronous>, transform_indices = @transform_4, window_bounds = array<i64: 32, 128>}, {pipeline_mode = #tpu.pipeline_mode<synchronous>, transform_indices = @transform_5, window_bounds = array<i64: 1, 128>}, {transform_indices = @transform_6, window_bounds = array<i64: 2, 128>}]} {
    %c0 = arith.constant 0 : index
    %c0_0 = arith.constant 0 : index
    %0 = vector.load %arg4[%c0, %c0_0] : memref<1x512xf32, #tpu.memory_space<vmem>>, vector<1x512xf32>
    %1 = vector.shape_cast %0 : vector<1x512xf32> to vector<1x1x512xf32>
    %c0_1 = arith.constant 0 : index
    %c0_2 = arith.constant 0 : index
    %2 = vector.load %arg3[%c0_1, %c0_2] : memref<1x512xf32, #tpu.memory_space<vmem>>, vector<1x512xf32>
    %cst = arith.constant 0xFF800000 : f32
    %3 = vector.broadcast %cst : f32 to vector<2x1xf32>
    %cst_3 = arith.constant 0.000000e+00 : f32
    %4 = vector.broadcast %cst_3 : f32 to vector<2x1xf32>
    %cst_4 = arith.constant 0.000000e+00 : f32
    %5 = vector.broadcast %cst_4 : f32 to vector<2x128xf32>
    %c0_5 = arith.constant 0 : index
    %c0_6 = arith.constant 0 : index
    %c0_7 = arith.constant 0 : index
    %6 = vector.load %arg1[%c0_5, %c0_6, %c0_7] : memref<2x8x32xf32, #tpu.memory_space<vmem>>, vector<2x8x32xf32>
    %7 = vector.shape_cast %6 : vector<2x8x32xf32> to vector<16x32xf32>
    %c0_8 = arith.constant 0 : index
    %c0_9 = arith.constant 0 : index
    %8 = vector.load %arg2[%c0_8, %c0_9] : memref<32x512xf32, #tpu.memory_space<vmem>>, vector<32x512xf32>
    %cst_10 = arith.constant dense<0.000000e+00> : vector<16x512xf32>
    %9 = tpu.matmul %7, %8, %cst_10 {dimension_numbers = #tpu.dot_dimension_numbers<[1], [0], [0], [1], [0, 0, 1, 1], [], []>} : vector<16x32xf32>, vector<32x512xf32>, vector<16x512xf32> -> vector<16x512xf32>
    %10 = vector.broadcast %2 : vector<1x512xf32> to vector<16x512xf32>
    %11 = arith.addf %9, %10 : vector<16x512xf32>
    %12 = math.tanh %11 : vector<16x512xf32>
    %13 = vector.shape_cast %12 : vector<16x512xf32> to vector<2x8x512xf32>
    %14 = vector.broadcast %1 : vector<1x1x512xf32> to vector<2x8x512xf32>
    %15 = arith.mulf %13, %14 : vector<2x8x512xf32>
    %cst_11 = arith.constant dense<0.000000e+00> : vector<2x8xf32>
    %16 = vector.multi_reduction <add>, %15, %cst_11 [2] : vector<2x8x512xf32> to vector<2x8xf32>
    %c0_12 = arith.constant 0 : index
    %c0_13 = arith.constant 0 : index
    %17 = vector.load %arg5[%c0_12, %c0_13] : memref<32x128xf32, #tpu.memory_space<vmem>>, vector<32x128xf32>
    %cst_14 = arith.constant dense<0.000000e+00> : vector<16x128xf32>
    %18 = tpu.matmul %7, %17, %cst_14 {dimension_numbers = #tpu.dot_dimension_numbers<[1], [0], [0], [1], [0, 0, 1, 1], [], []>} : vector<16x32xf32>, vector<32x128xf32>, vector<16x128xf32> -> vector<16x128xf32>
    %19 = vector.shape_cast %18 : vector<16x128xf32> to vector<2x8x128xf32>
    %cst_15 = arith.constant dense<0xFF800000> : vector<2xf32>
    %20 = vector.multi_reduction <maximumf>, %16, %cst_15 [1] : vector<2x8xf32> to vector<2xf32>
    %21 = vector.shape_cast %20 : vector<2xf32> to vector<2x1xf32>
    %22 = arith.maximumf %3, %21 : vector<2x1xf32>
    %23 = arith.subf %3, %22 : vector<2x1xf32>
    %24 = math.exp %23 : vector<2x1xf32>
    %25 = vector.broadcast %22 : vector<2x1xf32> to vector<2x8xf32>
    %26 = arith.subf %16, %25 : vector<2x8xf32>
    %27 = math.exp %26 : vector<2x8xf32>
    %28 = arith.mulf %24, %4 : vector<2x1xf32>
    %cst_16 = arith.constant dense<0.000000e+00> : vector<2xf32>
    %29 = vector.multi_reduction <add>, %27, %cst_16 [1] : vector<2x8xf32> to vector<2xf32>
    %30 = vector.shape_cast %29 : vector<2xf32> to vector<2x1xf32>
    %31 = arith.addf %28, %30 : vector<2x1xf32>
    %32 = vector.broadcast %24 : vector<2x1xf32> to vector<2x128xf32>
    %33 = arith.mulf %32, %5 : vector<2x128xf32>
    %34 = vector.shape_cast %27 : vector<2x8xf32> to vector<2x8x1xf32>
    %35 = vector.broadcast %34 : vector<2x8x1xf32> to vector<2x8x128xf32>
    %36 = arith.mulf %35, %19 : vector<2x8x128xf32>
    %cst_17 = arith.constant dense<0.000000e+00> : vector<2x128xf32>
    %37 = vector.multi_reduction <add>, %36, %cst_17 [1] : vector<2x8x128xf32> to vector<2x128xf32>
    %38 = arith.addf %33, %37 : vector<2x128xf32>
    %39 = vector.broadcast %31 : vector<2x1xf32> to vector<2x128xf32>
    %40 = arith.divf %38, %39 : vector<2x128xf32>
    %c0_18 = arith.constant 0 : index
    %c0_19 = arith.constant 0 : index
    %41 = vector.load %arg6[%c0_18, %c0_19] : memref<1x128xf32, #tpu.memory_space<vmem>>, vector<1x128xf32>
    %42 = vector.broadcast %41 : vector<1x128xf32> to vector<2x128xf32>
    %43 = arith.addf %40, %42 : vector<2x128xf32>
    %c0_20 = arith.constant 0 : index
    %c0_21 = arith.constant 0 : index
    %44 = vector.load %arg7[%c0_20, %c0_21] : memref<2x128xf32, #tpu.memory_space<vmem>>, vector<2x128xf32>
    tpu.vector_store %arg7[%c0_20, %c0_21], %43 {strides = array<i32>} : memref<2x128xf32, #tpu.memory_space<vmem>>, vector<2x128xf32>,
    return
  }
  func.func @transform_0(%arg0: i32) -> (i32, i32, i32) {
    %c0_i32 = arith.constant 0 : i32
    %c0_i32_0 = arith.constant 0 : i32
    %c0_i32_1 = arith.constant 0 : i32
    return %arg0, %c0_i32, %c0_i32_0 : i32, i32, i32
  }
  func.func @transform_1(%arg0: i32) -> (i32, i32) {
    %c0_i32 = arith.constant 0 : i32
    %c0_i32_0 = arith.constant 0 : i32
    %c0_i32_1 = arith.constant 0 : i32
    return %c0_i32, %c0_i32_0 : i32, i32
  }
  func.func @transform_2(%arg0: i32) -> (i32, i32) {
    %c0_i32 = arith.constant 0 : i32
    %c0_i32_0 = arith.constant 0 : i32
    %c0_i32_1 = arith.constant 0 : i32
    return %c0_i32, %c0_i32_0 : i32, i32
  }
  func.func @transform_3(%arg0: i32) -> (i32, i32) {
    %c0_i32 = arith.constant 0 : i32
    %c0_i32_0 = arith.constant 0 : i32
    %c0_i32_1 = arith.constant 0 : i32
    return %c0_i32, %c0_i32_0 : i32, i32
  }
  func.func @transform_4(%arg0: i32) -> (i32, i32) {
    %c0_i32 = arith.constant 0 : i32
    %c0_i32_0 = arith.constant 0 : i32
    %c0_i32_1 = arith.constant 0 : i32
    return %c0_i32, %c0_i32_0 : i32, i32
  }
  func.func @transform_5(%arg0: i32) -> (i32, i32) {
    %c0_i32 = arith.constant 0 : i32
    %c0_i32_0 = arith.constant 0 : i32
    %c0_i32_1 = arith.constant 0 : i32
    return %c0_i32, %c0_i32_0 : i32, i32
  }
  func.func @transform_6(%arg0: i32) -> (i32, i32) {
    %c0_i32 = arith.constant 0 : i32
    %c0_i32_0 = arith.constant 0 : i32
    return %arg0, %c0_i32 : i32, i32
  }
}

module attributes {stable_mosaic.version = 11 : i64} {
  func.func @_classifier_head_kernel(%arg0: i32, %arg1: memref<2x8x32xf32, #tpu.memory_space<vmem>>, %arg2: memref<32x512xf32, #tpu.memory_space<vmem>>, %arg3: memref<1x512xf32, #tpu.memory_space<vmem>>, %arg4: memref<1x512xf32, #tpu.memory_space<vmem>>, %arg5: memref<32x128xf32, #tpu.memory_space<vmem>>, %arg6: memref<1x128xf32, #tpu.memory_space<vmem>>, %arg7: memref<2x128xf32, #tpu.memory_space<vmem>>) attributes {dimension_semantics = [#tpu.dimension_semantics<parallel>], iteration_bounds = array<i64: 1>, scalar_prefetch = 0 : i64, scratch_operands = 0 : i64, tpu.core_type = #tpu.core_type<tc>, window_params = [{transform_indices = @transform_0, window_bounds = array<i64: 2, 8, 32>}, {pipeline_mode = #tpu.pipeline_mode<synchronous>, transform_indices = @transform_1, window_bounds = array<i64: 32, 512>}, {pipeline_mode = #tpu.pipeline_mode<synchronous>, transform_indices = @transform_2, window_bounds = array<i64: 1, 512>}, {pipeline_mode = #tpu.pipeline_mode<synchronous>, transform_indices = @transform_3, window_bounds = array<i64: 1, 512>}, {pipeline_mode = #tpu.pipeline_mode<synchronous>, transform_indices = @transform_4, window_bounds = array<i64: 32, 128>}, {pipeline_mode = #tpu.pipeline_mode<synchronous>, transform_indices = @transform_5, window_bounds = array<i64: 1, 128>}, {transform_indices = @transform_6, window_bounds = array<i64: 2, 128>}]} {
    %c0 = arith.constant 0 : index
    %c0_0 = arith.constant 0 : index
    %0 = vector.load %arg4[%c0, %c0_0] : memref<1x512xf32, #tpu.memory_space<vmem>>, vector<1x512xf32>
    %1 = vector.shape_cast %0 : vector<1x512xf32> to vector<1x1x512xf32>
    %c0_1 = arith.constant 0 : index
    %c0_2 = arith.constant 0 : index
    %2 = vector.load %arg3[%c0_1, %c0_2] : memref<1x512xf32, #tpu.memory_space<vmem>>, vector<1x512xf32>
    %cst = arith.constant 0xFF800000 : f32
    %3 = vector.broadcast %cst : f32 to vector<2x1xf32>
    %cst_3 = arith.constant 0.000000e+00 : f32
    %4 = vector.broadcast %cst_3 : f32 to vector<2x1xf32>
    %cst_4 = arith.constant 0.000000e+00 : f32
    %5 = vector.broadcast %cst_4 : f32 to vector<2x128xf32>
    %c0_5 = arith.constant 0 : index
    %c0_6 = arith.constant 0 : index
    %c0_7 = arith.constant 0 : index
    %6 = vector.load %arg1[%c0_5, %c0_6, %c0_7] : memref<2x8x32xf32, #tpu.memory_space<vmem>>, vector<2x8x32xf32>
    %7 = vector.shape_cast %6 : vector<2x8x32xf32> to vector<16x32xf32>
    %c0_8 = arith.constant 0 : index
    %c0_9 = arith.constant 0 : index
    %8 = vector.load %arg2[%c0_8, %c0_9] : memref<32x512xf32, #tpu.memory_space<vmem>>, vector<32x512xf32>
    %cst_10 = arith.constant dense<0.000000e+00> : vector<16x512xf32>
    %9 = tpu.matmul %7, %8, %cst_10 {dimension_numbers = #tpu.dot_dimension_numbers<[1], [0], [0], [1], [0, 0, 1, 1], [], []>} : vector<16x32xf32>, vector<32x512xf32>, vector<16x512xf32> -> vector<16x512xf32>
    %10 = vector.broadcast %2 : vector<1x512xf32> to vector<16x512xf32>
    %11 = arith.addf %9, %10 : vector<16x512xf32>
    %12 = math.tanh %11 : vector<16x512xf32>
    %13 = vector.shape_cast %12 : vector<16x512xf32> to vector<2x8x512xf32>
    %14 = vector.broadcast %1 : vector<1x1x512xf32> to vector<2x8x512xf32>
    %15 = arith.mulf %13, %14 : vector<2x8x512xf32>
    %cst_11 = arith.constant dense<0.000000e+00> : vector<2x8xf32>
    %16 = vector.multi_reduction <add>, %15, %cst_11 [2] : vector<2x8x512xf32> to vector<2x8xf32>
    %c0_12 = arith.constant 0 : index
    %c0_13 = arith.constant 0 : index
    %17 = vector.load %arg5[%c0_12, %c0_13] : memref<32x128xf32, #tpu.memory_space<vmem>>, vector<32x128xf32>
    %cst_14 = arith.constant dense<0.000000e+00> : vector<16x128xf32>
    %18 = tpu.matmul %7, %17, %cst_14 {dimension_numbers = #tpu.dot_dimension_numbers<[1], [0], [0], [1], [0, 0, 1, 1], [], []>} : vector<16x32xf32>, vector<32x128xf32>, vector<16x128xf32> -> vector<16x128xf32>
    %19 = vector.shape_cast %18 : vector<16x128xf32> to vector<2x8x128xf32>
    %cst_15 = arith.constant dense<0xFF800000> : vector<2xf32>
    %20 = vector.multi_reduction <maximumf>, %16, %cst_15 [1] : vector<2x8xf32> to vector<2xf32>
    %21 = vector.shape_cast %20 : vector<2xf32> to vector<2x1xf32>
    %22 = arith.maximumf %3, %21 : vector<2x1xf32>
    %23 = arith.subf %3, %22 : vector<2x1xf32>
    %24 = math.exp %23 : vector<2x1xf32>
    %25 = vector.broadcast %22 : vector<2x1xf32> to vector<2x8xf32>
    %26 = arith.subf %16, %25 : vector<2x8xf32>
    %27 = math.exp %26 : vector<2x8xf32>
    %28 = arith.mulf %24, %4 : vector<2x1xf32>
    %cst_16 = arith.constant dense<0.000000e+00> : vector<2xf32>
    %29 = vector.multi_reduction <add>, %27, %cst_16 [1] : vector<2x8xf32> to vector<2xf32>
    %30 = vector.shape_cast %29 : vector<2xf32> to vector<2x1xf32>
    %31 = arith.addf %28, %30 : vector<2x1xf32>
    %32 = vector.broadcast %24 : vector<2x1xf32> to vector<2x128xf32>
    %33 = arith.mulf %32, %5 : vector<2x128xf32>
    %34 = vector.shape_cast %27 : vector<2x8xf32> to vector<2x8x1xf32>
    %35 = vector.broadcast %34 : vector<2x8x1xf32> to vector<2x8x128xf32>
    %36 = arith.mulf %35, %19 : vector<2x8x128xf32>
    %cst_17 = arith.constant dense<0.000000e+00> : vector<2x128xf32>
    %37 = vector.multi_reduction <add>, %36, %cst_17 [1] : vector<2x8x128xf32> to vector<2x128xf32>
    %38 = arith.addf %33, %37 : vector<2x128xf32>
    %39 = vector.broadcast %31 : vector<2x1xf32> to vector<2x128xf32>
    %40 = arith.divf %38, %39 : vector<2x128xf32>
    %c0_18 = arith.constant 0 : index
    %c0_19 = arith.constant 0 : index
    %41 = vector.load %arg6[%c0_18, %c0_19] : memref<1x128xf32, #tpu.memory_space<vmem>>, vector<1x128xf32>
    %42 = vector.broadcast %41 : vector<1x128xf32> to vector<2x128xf32>
    %43 = arith.addf %40, %42 : vector<2x128xf32>
    %c0_20 = arith.constant 0 : index
    %c0_21 = arith.constant 0 : index
    %44 = vector.load %arg7[%c0_20, %c0_21] : memref<2x128xf32, #tpu.memory_space<vmem>>, vector<2x128xf32>
    tpu.vector_store %arg7[%c0_20, %c0_21], %43 {strides = array<i32>} : memref<2x128xf32, #tpu.memory_space<vmem>>, vector<2x128xf32>,
    return
  }
  func.func @transform_0(%arg0: i32) -> (i32, i32, i32) {
    %c0_i32 = arith.constant 0 : i32
    %c0_i32_0 = arith.constant 0 : i32
    %c0_i32_1 = arith.constant 0 : i32
    return %arg0, %c0_i32, %c0_i32_0 : i32, i32, i32
  }
  func.func @transform_1(%arg0: i32) -> (i32, i32) {
    %c0_i32 = arith.constant 0 : i32
    %c0_i32_0 = arith.constant 0 : i32
    %c0_i32_1 = arith.constant 0 : i32
    return %c0_i32, %c0_i32_0 : i32, i32
  }
  func.func @transform_2(%arg0: i32) -> (i32, i32) {
    %c0_i32 = arith.constant 0 : i32
    %c0_i32_0 = arith.constant 0 : i32
    %c0_i32_1 = arith.constant 0 : i32
    return %c0_i32, %c0_i32_0 : i32, i32
  }
  func.func @transform_3(%arg0: i32) -> (i32, i32) {
    %c0_i32 = arith.constant 0 : i32
    %c0_i32_0 = arith.constant 0 : i32
    %c0_i32_1 = arith.constant 0 : i32
    return %c0_i32, %c0_i32_0 : i32, i32
  }
  func.func @transform_4(%arg0: i32) -> (i32, i32) {
    %c0_i32 = arith.constant 0 : i32
    %c0_i32_0 = arith.constant 0 : i32
    %c0_i32_1 = arith.constant 0 : i32
    return %c0_i32, %c0_i32_0 : i32, i32
  }
  func.func @transform_5(%arg0: i32) -> (i32, i32) {
    %c0_i32 = arith.constant 0 : i32
    %c0_i32_0 = arith.constant 0 : i32
    %c0_i32_1 = arith.constant 0 : i32
    return %c0_i32, %c0_i32_0 : i32, i32
  }
  func.func @transform_6(%arg0: i32) -> (i32, i32) {
    %c0_i32 = arith.constant 0 : i32
    %c0_i32_0 = arith.constant 0 : i32
    return %arg0, %c0_i32 : i32, i32
  }
}

</mosaic_0001>

<llo_original>
// kernel: tpu_custom_call.1
$region0: #{tpu_custom_call.1}
  #allocation0 [shape = 'u32[]', space=smem, size = 0x4, offset = 0x4, fixed_abs, tag = 'smem constant byte address 0x4 - core index']
  #allocation1 [shape = 'u32[144,128]{1,0:T(1,128)}', space=vmem, size = 0x12000, scoped, tag = 'internal scratch']
  %s0 = inlined_call_operand.hbm [shape: f32[2,8,32], index: 0, kind: input, shape index: {}]
  %s1 = inlined_call_operand.hbm [shape: f32[32,512], index: 1, kind: input, shape index: {}]
  %s2 = inlined_call_operand.vmem [shape: f32[1,512], index: 2, kind: input, shape index: {}]
  %s3 = inlined_call_operand.vmem [shape: f32[1,512], index: 3, kind: input, shape index: {}]
  %s4 = inlined_call_operand.hbm [shape: f32[32,128], index: 4, kind: input, shape index: {}]
  %s5 = inlined_call_operand.vmem [shape: f32[1,128], index: 5, kind: input, shape index: {}]
  %s6 = inlined_call_operand.hbm [shape: f32[2,128], index: 6, kind: output, shape index: {}]
  %s7 = sld [smem:[#allocation0]]
  $region46: #{tpu_custom_call.1} parent=0
    _
  %s9 = ssub.s32 1, %s7
  %s10 = scalar_select 0, %s9, %s7
  $region1: #{tpu_custom_call.1} parent=0
    #allocation2 [shape = 'u8[8192]{0}', space=vmem, size = 0x2000, scoped, tag = 'input window, operand 0, single buffered']
    #allocation3 [shape = 's32[1]{0}', space=sflag, size = 0x4, scoped, tag = 'scoped memory for tpu_custom_call.1']
    #allocation4 [shape = 's32[1]{0}', space=sflag, size = 0x4, scoped, tag = 'scoped memory for tpu_custom_call.1']
    #allocation5 [shape = 'u8[65536]{0}', space=vmem, size = 0x10000, scoped, tag = 'input window, operand 1, single buffered']
    #allocation6 [shape = 's32[1]{0}', space=sflag, size = 0x4, scoped, tag = 'scoped memory for tpu_custom_call.1']
    #allocation7 [shape = 'u8[16384]{0}', space=vmem, size = 0x4000, scoped, tag = 'input window, operand 4, single buffered']
    #allocation8 [shape = 'u8[1024]{0}', space=vmem, size = 0x400, scoped, tag = 'output window, operand 0, single buffered']
    %11 = vsyncpa [#allocation3], 0
    %12 = vsyncpa [#allocation6], 0
    %13 = vsyncpa [#allocation4], 0
    // Predicated region
    $region2: #{tpu_custom_call.1} parent=1 // pred_check
      _
    $region3: #{tpu_custom_call.1} parent=1 // pred_check_branch
      %15 = sbr.rel (0) target = $region5
    $region4: #{tpu_custom_call.1} parent=1 // pred_region
      %s17 = ssub.s32 256, 256
      %18 = vsyncadd [#allocation3], %s17
      %s19 = sshll.u32 [#allocation2], 4
      %s20 = int_to_ptr.vmem [resolvable:$true] %s19
      %25 = dma.hbm_to_vmem [thread:$0]  %s0, 256, %s20, [#allocation3], 128, 128, 8
    $region5: #{tpu_custom_call.1} parent=1 // pred_fallthru
      _
    // Predicated region
    $region6: #{tpu_custom_call.1} parent=1 // pred_check
      _
    $region7: #{tpu_custom_call.1} parent=1 // pred_check_branch
      %27 = sbr.rel (0) target = $region9
    $region8: #{tpu_custom_call.1} parent=1 // pred_region
      %s29 = ssub.s32 2048, 2048
      %30 = vsyncadd [#allocation6], %s29
      %s31 = sshll.u32 [#allocation5], 4
      %s32 = int_to_ptr.vmem [resolvable:$true] %s31
      %37 = dma.hbm_to_vmem [thread:$0]  %s1, 2048, %s32, [#allocation6], 512, 512, 32
    $region9: #{tpu_custom_call.1} parent=1 // pred_fallthru
      _
    // Predicated region
    $region10: #{tpu_custom_call.1} parent=1 // pred_check
      _
    $region11: #{tpu_custom_call.1} parent=1 // pred_check_branch
      %39 = sbr.rel (0) target = $region13
    $region12: #{tpu_custom_call.1} parent=1 // pred_region
      _
    $region13: #{tpu_custom_call.1} parent=1 // pred_fallthru
      _
    // Predicated region
    $region14: #{tpu_custom_call.1} parent=1 // pred_check
      _
    $region15: #{tpu_custom_call.1} parent=1 // pred_check_branch
      %41 = sbr.rel (0) target = $region17
    $region16: #{tpu_custom_call.1} parent=1 // pred_region
      _
    $region17: #{tpu_custom_call.1} parent=1 // pred_fallthru
      _
    // Predicated region
    $region18: #{tpu_custom_call.1} parent=1 // pred_check
      _
    $region19: #{tpu_custom_call.1} parent=1 // pred_check_branch
      %43 = sbr.rel (0) target = $region21
    $region20: #{tpu_custom_call.1} parent=1 // pred_region
      %s45 = ssub.s32 512, 512
      %46 = vsyncadd [#allocation6], %s45
      %s47 = sshll.u32 [#allocation7], 4
      %s48 = int_to_ptr.vmem [resolvable:$true] %s47
      %53 = dma.hbm_to_vmem [thread:$0]  %s4, 512, %s48, [#allocation6], 128, 128, 8
    $region21: #{tpu_custom_call.1} parent=1 // pred_fallthru
      _
    // Predicated region
    $region22: #{tpu_custom_call.1} parent=1 // pred_check
      _
    $region23: #{tpu_custom_call.1} parent=1 // pred_check_branch
      %55 = sbr.rel (0) target = $region25
    $region24: #{tpu_custom_call.1} parent=1 // pred_region
      _
    $region25: #{tpu_custom_call.1} parent=1 // pred_fallthru
      _
    // Predicated region
    $region26: #{tpu_custom_call.1} parent=1 // pred_check
      _
    $region27: #{tpu_custom_call.1} parent=1 // pred_check_branch
      %57 = sbr.rel (0) target = $region29
    $region28: #{tpu_custom_call.1} parent=1 // pred_region
      %58 = dma.done [#allocation3], 256
    $region29: #{tpu_custom_call.1} parent=1 // pred_fallthru
      _
    // Predicated region
    $region30: #{tpu_custom_call.1} parent=1 // pred_check
      _
    $region31: #{tpu_custom_call.1} parent=1 // pred_check_branch
      %60 = sbr.rel (0) target = $region33
    $region32: #{tpu_custom_call.1} parent=1 // pred_region
      %61 = dma.done [#allocation6], 2048
    $region33: #{tpu_custom_call.1} parent=1 // pred_fallthru
      _
    // Predicated region
    $region34: #{tpu_custom_call.1} parent=1 // pred_check
      _
    $region35: #{tpu_custom_call.1} parent=1 // pred_check_branch
      %63 = sbr.rel (0) target = $region37
    $region36: #{tpu_custom_call.1} parent=1 // pred_region
      %64 = dma.done [#allocation6], 512
    $region37: #{tpu_custom_call.1} parent=1 // pred_fallthru
      _
    %v65 = vld [vmem:[%s3] sm:$0xf]
    %v66 = vld [vmem:[%s2] sm:$0xf]
    %v67 = vld [vmem:[#allocation2] sm:$0xff]
    %v68 = vld [vmem:[#allocation2 + $0x8] sm:$0xff]
    %v69 = vld [vmem:[#allocation5] sm:$0xff]
    %v70 = vld [vmem:[#allocation5 + $0x8] sm:$0xff]
    %v71 = vld [vmem:[#allocation5 + $0x10] sm:$0xff]
    %v72 = vld [vmem:[#allocation5 + $0x18] sm:$0xff]
    %v73 = vld [vmem:[#allocation5 + $0x20] sm:$0xff]
    %v74 = vld [vmem:[#allocation5 + $0x28] sm:$0xff]
    %v75 = vld [vmem:[#allocation5 + $0x30] sm:$0xff]
    %v76 = vld [vmem:[#allocation5 + $0x38] sm:$0xff]
    %v77 = vld [vmem:[#allocation5 + $0x40] sm:$0xff]
    %v78 = vld [vmem:[#allocation5 + $0x48] sm:$0xff]
    %v79 = vld [vmem:[#allocation5 + $0x50] sm:$0xff]
    %v80 = vld [vmem:[#allocation5 + $0x58] sm:$0xff]
    %v81 = vld [vmem:[#allocation5 + $0x60] sm:$0xff]
    %v82 = vld [vmem:[#allocation5 + $0x68] sm:$0xff]
    %v83 = vld [vmem:[#allocation5 + $0x70] sm:$0xff]
    %v84 = vld [vmem:[#allocation5 + $0x78] sm:$0xff]
    %v86 = vlaneseq
    %v87 = vshrl.u32 %v86, 7
    %v88 = vsub.s32 0, %v87
    %v89 = vrot.slane %v66, %v88
    %v90 = vlaneseq
    %v91 = vshrl.u32 %v90, 7
    %v92 = vsub.s32 1, %v91
    %v93 = vrot.slane %v66, %v92
    %v94 = vlaneseq
    %v95 = vshrl.u32 %v94, 7
    %v96 = vsub.s32 2, %v95
    %v97 = vrot.slane %v66, %v96
    %v98 = vlaneseq
    %v99 = vshrl.u32 %v98, 7
    %v100 = vsub.s32 3, %v99
    %v101 = vrot.slane %v66, %v100
    %vm106 = vcmask 261120
    %v108 = vsel %vm106, %v67, 0
    %v111 = vsel %vm106, %v68, 0
    %113 = vmatprep.subr.mxu0 %v70
    %114 = vmatpush1.msra.mxu0 %v69
    %115 = vmatprep.subr.mxu0 %v74
    %116 = vmatpush1.msra.mxu0 %v73
    %117 = vmatprep.subr.mxu0 %v78
    %118 = vmatpush1.msra.mxu0 %v77
    %119 = vmatprep.subr.mxu0 %v82
    %120 = vmatpush1.msra.mxu0 %v81
    %121 = vmatprep.subr.mxu0 0.0
    %122 = vmatpush1.msra.mxu0 0.0
    %123 = vmatprep.subr.mxu0 0.0
    %124 = vmatpush1.msra.mxu0 0.0
    %125 = vmatprep.subr.mxu0 0.0
    %126 = vmatpush1.msra.mxu0 0.0
    %127 = vmatprep.subr.mxu0 0.0
    %128 = vmatpush1.msra.mxu0 0.0
    %129 = vmatprep.subr.mxu0 0.0
    %130 = vmatpush1.msra.mxu0 0.0
    %131 = vmatprep.subr.mxu0 0.0
    %132 = vmatpush1.msra.mxu0 0.0
    %133 = vmatprep.subr.mxu0 0.0
    %134 = vmatpush1.msra.mxu0 0.0
    %135 = vmatprep.subr.mxu0 0.0
    %136 = vmatpush1.msra.mxu0 0.0
    %137 = vmatprep.subr.mxu0 0.0
    %138 = vmatpush1.msra.mxu0 0.0
    %139 = vmatprep.subr.mxu0 0.0
    %140 = vmatpush1.msra.mxu0 0.0
    %141 = vmatprep.subr.mxu0 0.0
    %142 = vmatpush1.msra.mxu0 0.0
    %143 = vmatprep.subr.mxu0 0.0
    %144 = vmatpush1.msra.mxu0 0.0
    %145 = vmatprep.subr.mxu0 0.0
    %146 = vmatpush1.msra.mxu0 0.0
    %147 = vmatprep.subr.mxu0 0.0
    %148 = vmatpush1.msra.mxu0 0.0
    %149 = vmatprep.subr.mxu0 0.0
    %150 = vmatpush1.msra.mxu0 0.0
    %151 = vmatprep.subr.mxu0 0.0
    %152 = vmatpush1.msra.mxu0 0.0
    %153 = vmatprep.subr.mxu0 0.0
    %154 = vmatpush1.msra.mxu0 0.0
    %155 = vmatprep.subr.mxu0 0.0
    %156 = vmatpush1.msra.mxu0 0.0
    %157 = vmatprep.subr.mxu0 0.0
    %158 = vmatpush1.msra.mxu0 0.0
    %159 = vmatprep.subr.mxu0 0.0
    %160 = vmatpush1.msra.mxu0 0.0
    %161 = vmatprep.subr.mxu0 0.0
    %162 = vmatpush1.msra.mxu0 0.0
    %163 = vmatprep.subr.mxu0 0.0
    %164 = vmatpush1.msra.mxu0 0.0
    %165 = vmatprep.subr.mxu0 0.0
    %166 = vmatpush1.msra.mxu0 0.0
    %167 = vmatprep.subr.mxu0 0.0
    %168 = vmatpush1.msra.mxu0 0.0
    %169 = vmatprep.subr.mxu0 0.0
    %170 = vmatpush1.msra.mxu0 0.0
    %171 = vmatprep.subr.mxu0 0.0
    %172 = vmatpush1.msra.mxu0 0.0
    %173 = vmatprep.subr.mxu0 0.0
    %174 = vmatpush1.msra.mxu0 0.0
    %175 = vmatprep.subr.mxu0 0.0
    %176 = vmatpush1.msra.mxu0 0.0
    %177 = vmatprep.mubr.f32.mxu0 0.0
    %178 = vmatmul.mubr.f32.gmra.mrb[0].mxu0 %v108
    %v179 = vpop.f32.mrb[0].mxu0
    %v180 = vadd.f32 %v89, %v179
    %v181 = vpop.f32.mrb[0].mxu0
    %v182 = vadd.f32 %v93, %v181
    %183 = vmatprep.mubr.f32.mxu0 0.0
    %184 = vmatmul.mubr.f32.gmra.mrb[0].mxu0 %v111
    %v185 = vpop.f32.mrb[0].mxu0
    %v186 = vadd.f32 %v89, %v185
    %v187 = vpop.f32.mrb[0].mxu0
    %v188 = vadd.f32 %v93, %v187
    %189 = vdwg.mxu0
    %190 = vmatprep.subr.mxu0 %v72
    %191 = vmatpush1.msra.mxu0 %v71
    %192 = vmatprep.subr.mxu0 %v76
    %193 = vmatpush1.msra.mxu0 %v75
    %194 = vmatprep.subr.mxu0 %v80
    %195 = vmatpush1.msra.mxu0 %v79
    %196 = vmatprep.subr.mxu0 %v84
    %197 = vmatpush1.msra.mxu0 %v83
    %198 = vmatprep.subr.mxu0 0.0
    %199 = vmatpush1.msra.mxu0 0.0
    %200 = vmatprep.subr.mxu0 0.0
    %201 = vmatpush1.msra.mxu0 0.0
    %202 = vmatprep.subr.mxu0 0.0
    %203 = vmatpush1.msra.mxu0 0.0
    %204 = vmatprep.subr.mxu0 0.0
    %205 = vmatpush1.msra.mxu0 0.0
    %206 = vmatprep.subr.mxu0 0.0
    %207 = vmatpush1.msra.mxu0 0.0
    %208 = vmatprep.subr.mxu0 0.0
    %209 = vmatpush1.msra.mxu0 0.0
    %210 = vmatprep.subr.mxu0 0.0
    %211 = vmatpush1.msra.mxu0 0.0
    %212 = vmatprep.subr.mxu0 0.0
    %213 = vmatpush1.msra.mxu0 0.0
    %214 = vmatprep.subr.mxu0 0.0
    %215 = vmatpush1.msra.mxu0 0.0
    %216 = vmatprep.subr.mxu0 0.0
    %217 = vmatpush1.msra.mxu0 0.0
    %218 = vmatprep.subr.mxu0 0.0
    %219 = vmatpush1.msra.mxu0 0.0
    %220 = vmatprep.subr.mxu0 0.0
    %221 = vmatpush1.msra.mxu0 0.0
    %222 = vmatprep.subr.mxu0 0.0
    %223 = vmatpush1.msra.mxu0 0.0
    %224 = vmatprep.subr.mxu0 0.0
    %225 = vmatpush1.msra.mxu0 0.0
    %226 = vmatprep.subr.mxu0 0.0
    %227 = vmatpush1.msra.mxu0 0.0
    %228 = vmatprep.subr.mxu0 0.0
    %229 = vmatpush1.msra.mxu0 0.0
    %230 = vmatprep.subr.mxu0 0.0
    %231 = vmatpush1.msra.mxu0 0.0
    %232 = vmatprep.subr.mxu0 0.0
    %233 = vmatpush1.msra.mxu0 0.0
    %234 = vmatprep.subr.mxu0 0.0
    %235 = vmatpush1.msra.mxu0 0.0
    %236 = vmatprep.subr.mxu0 0.0
    %237 = vmatpush1.msra.mxu0 0.0
    %238 = vmatprep.subr.mxu0 0.0
    %239 = vmatpush1.msra.mxu0 0.0
    %240 = vmatprep.subr.mxu0 0.0
    %241 = vmatpush1.msra.mxu0 0.0
    %242 = vmatprep.subr.mxu0 0.0
    %243 = vmatpush1.msra.mxu0 0.0
    %244 = vmatprep.subr.mxu0 0.0
    %245 = vmatpush1.msra.mxu0 0.0
    %246 = vmatprep.subr.mxu0 0.0
    %247 = vmatpush1.msra.mxu0 0.0
    %248 = vmatprep.subr.mxu0 0.0
    %249 = vmatpush1.msra.mxu0 0.0
    %250 = vmatprep.subr.mxu0 0.0
    %251 = vmatpush1.msra.mxu0 0.0
    %252 = vmatprep.subr.mxu0 0.0
    %253 = vmatpush1.msra.mxu0 0.0
    %254 = vmatprep.mubr.f32.mxu0 0.0
    %255 = vmatmul.mubr.f32.gmra.mrb[0].mxu0 %v108
    %v256 = vpop.f32.mrb[0].mxu0
    %v257 = vadd.f32 %v97, %v256
    %v258 = vpop.f32.mrb[0].mxu0
    %v259 = vadd.f32 %v101, %v258
    %260 = vmatprep.mubr.f32.mxu0 0.0
    %261 = vmatmul.mubr.f32.gmra.mrb[0].mxu0 %v111
    %v262 = vpop.f32.mrb[0].mxu0
    %v263 = vadd.f32 %v97, %v262
    %v264 = vpop.f32.mrb[0].mxu0
    %v265 = vadd.f32 %v101, %v264
    %266 = vdwg.mxu0
    %v267 = vtanh.pop %v180
    %v268 = vtanh.pop %v182
    %v269 = vtanh.pop %v257
    %v270 = vtanh.pop %v259
    %v271 = vtanh.pop %v186
    %v272 = vtanh.pop %v188
    %v273 = vtanh.pop %v263
    %v274 = vtanh.pop %v265
    %v276 = vlaneseq
    %v277 = vshrl.u32 %v276, 7
    %v278 = vsub.s32 0, %v277
    %v279 = vrot.slane %v65, %v278
    %v280 = vlaneseq
    %v281 = vshrl.u32 %v280, 7
    %v282 = vsub.s32 1, %v281
    %v283 = vrot.slane %v65, %v282
    %v284 = vlaneseq
    %v285 = vshrl.u32 %v284, 7
    %v286 = vsub.s32 2, %v285
    %v287 = vrot.slane %v65, %v286
    %v288 = vlaneseq
    %v289 = vshrl.u32 %v288, 7
    %v290 = vsub.s32 3, %v289
    %v291 = vrot.slane %v65, %v290
    %v296 = vmul.f32 %v267, %v279
    %v297 = vmul.f32 %v268, %v283
    %v298 = vmul.f32 %v269, %v287
    %v299 = vmul.f32 %v270, %v291
    %v300 = vmul.f32 %v271, %v279
    %v301 = vmul.f32 %v272, %v283
    %v302 = vmul.f32 %v273, %v287
    %v303 = vmul.f32 %v274, %v291
    %v304 = vadd.f32 %v296, %v297
    %v305 = vadd.f32 %v304, %v298
    %v306 = vadd.f32 %v305, %v299
    %307 = vadd.xlane.f32.xlu0 %v306
    %v308 = vpop.xlane.xlu0 %307
    %v309 = vadd.f32 %v300, %v301
    %v310 = vadd.f32 %v309, %v302
    %v311 = vadd.f32 %v310, %v303
    %312 = vadd.xlane.f32.xlu0 %v311
    %v313 = vpop.xlane.xlu0 %312
    %v314 = vld [vmem:[#allocation7] sm:$0xff]
    %v315 = vld [vmem:[#allocation7 + $0x8] sm:$0xff]
    %v316 = vld [vmem:[#allocation7 + $0x10] sm:$0xff]
    %v317 = vld [vmem:[#allocation7 + $0x18] sm:$0xff]
    %318 = vmatprep.subr.mxu0 0.0
    %319 = vmatpush1.msra.mxu0 %v314
    %320 = vmatprep.subr.mxu0 0.0
    %321 = vmatpush1.msra.mxu0 %v315
    %322 = vmatprep.subr.mxu0 0.0
    %323 = vmatpush1.msra.mxu0 %v316
    %324 = vmatprep.subr.mxu0 0.0
    %325 = vmatpush1.msra.mxu0 %v317
    %326 = vmatprep.subr.mxu0 0.0
    %327 = vmatpush1.msra.mxu0 0.0
    %328 = vmatprep.subr.mxu0 0.0
    %329 = vmatpush1.msra.mxu0 0.0
    %330 = vmatprep.subr.mxu0 0.0
    %331 = vmatpush1.msra.mxu0 0.0
    %332 = vmatprep.subr.mxu0 0.0
    %333 = vmatpush1.msra.mxu0 0.0
    %334 = vmatprep.subr.mxu0 0.0
    %335 = vmatpush1.msra.mxu0 0.0
    %336 = vmatprep.subr.mxu0 0.0
    %337 = vmatpush1.msra.mxu0 0.0
    %338 = vmatprep.subr.mxu0 0.0
    %339 = vmatpush1.msra.mxu0 0.0
    %340 = vmatprep.subr.mxu0 0.0
    %341 = vmatpush1.msra.mxu0 0.0
    %342 = vmatprep.subr.mxu0 0.0
    %343 = vmatpush1.msra.mxu0 0.0
    %344 = vmatprep.subr.mxu0 0.0
    %345 = vmatpush1.msra.mxu0 0.0
    %346 = vmatprep.subr.mxu0 0.0
    %347 = vmatpush1.msra.mxu0 0.0
    %348 = vmatprep.subr.mxu0 0.0
    %349 = vmatpush1.msra.mxu0 0.0
    %350 = vmatprep.subr.mxu0 0.0
    %351 = vmatpush1.msra.mxu0 0.0
    %352 = vmatprep.subr.mxu0 0.0
    %353 = vmatpush1.msra.mxu0 0.0
    %354 = vmatprep.subr.mxu0 0.0
    %355 = vmatpush1.msra.mxu0 0.0
    %356 = vmatprep.subr.mxu0 0.0
    %357 = vmatpush1.msra.mxu0 0.0
    %358 = vmatprep.subr.mxu0 0.0
    %359 = vmatpush1.msra.mxu0 0.0
    %360 = vmatprep.subr.mxu0 0.0
    %361 = vmatpush1.msra.mxu0 0.0
    %362 = vmatprep.subr.mxu0 0.0
    %363 = vmatpush1.msra.mxu0 0.0
    %364 = vmatprep.subr.mxu0 0.0
    %365 = vmatpush1.msra.mxu0 0.0
    %366 = vmatprep.subr.mxu0 0.0
    %367 = vmatpush1.msra.mxu0 0.0
    %368 = vmatprep.subr.mxu0 0.0
    %369 = vmatpush1.msra.mxu0 0.0
    %370 = vmatprep.subr.mxu0 0.0
    %371 = vmatpush1.msra.mxu0 0.0
    %372 = vmatprep.subr.mxu0 0.0
    %373 = vmatpush1.msra.mxu0 0.0
    %374 = vmatprep.subr.mxu0 0.0
    %375 = vmatpush1.msra.mxu0 0.0
    %376 = vmatprep.subr.mxu0 0.0
    %377 = vmatpush1.msra.mxu0 0.0
    %378 = vmatprep.subr.mxu0 0.0
    %379 = vmatpush1.msra.mxu0 0.0
    %380 = vmatprep.subr.mxu0 0.0
    %381 = vmatpush1.msra.mxu0 0.0
    %382 = vmatprep.mubr.f32.mxu0 0.0
    %383 = vmatmul.mubr.f32.gmra.mrb[0].mxu0 %v108
    %v384 = vpop.f32.mrb[0].mxu0
    %v385 = vadd.f32 0.0, %v384
    %v386 = vpop.f32.mrb[0].mxu0
    %387 = vmatprep.mubr.f32.mxu0 0.0
    %388 = vmatmul.mubr.f32.gmra.mrb[0].mxu0 %v111
    %v389 = vpop.f32.mrb[0].mxu0
    %v390 = vadd.f32 0.0, %v389
    %v391 = vpop.f32.mrb[0].mxu0
    %392 = vdwg.mxu0
    %v395 = vlaneseq
    %v396 = vand.u32 %v395, 127
    %v397 = vlaneseq
    %v398 = vshrl.u32 %v397, 7
    %v399 = vsub.s32 %v396, %v398
    %v400 = vrot.slane %v308, %v399
    %v401 = vlaneseq
    %v402 = vshrl.u32 %v401, 7
    %v403 = vsub.s32 %v396, %v402
    %v404 = vrot.slane %v313, %v403
    %vm405 = vcmask 1041409
    %v406 = vsel %vm405, %v404, %v400
    %vm408 = vcmask 58368
    %v409 = vsel %vm408, %v406, -inf
    %410 = vmax.xlane.f32.xlu0 %v409
    %v411 = vpop.xlane.xlu0 %410
    %v412 = vsub.f32 -inf, %v411
    %v413 = vmul.f32 %v412, 1.442695
    %v414 = vpow.pop %v413
    %v416 = vlaneseq
    %v417 = vshrl.u32 %v416, 7
    %v418 = vsub.s32 0, %v417
    %v419 = vrot.slane %v411, %v418
    %v420 = vlaneseq
    %v421 = vshrl.u32 %v420, 7
    %v422 = vsub.s32 1, %v421
    %v423 = vrot.slane %v411, %v422
    %v426 = vsub.f32 %v308, %v419
    %v427 = vsub.f32 %v313, %v423
    %v428 = vmul.f32 %v426, 1.442695
    %v429 = vpow.pop %v428
    %v430 = vmul.f32 %v427, 1.442695
    %v431 = vpow.pop %v430
    %v432 = vmul.f32 %v414, 0.0
    %435 = vset.pattern.permute.xlu0 0
    %436 = vperm.xlu0 %435, %v429
    %v437 = vpop.permute.xlu0 %436
    %438 = vset.pattern.permute.xlu0 0
    %439 = vperm.xlu0 %438, %v431
    %v440 = vpop.permute.xlu0 %439
    %v441 = vlaneseq
    %v442 = vshrl.u32 %v441, 7
    %v443 = vsub.s32 %v396, %v442
    %v444 = vrot.slane %v437, %v443
    %v445 = vlaneseq
    %v446 = vshrl.u32 %v445, 7
    %v447 = vsub.s32 %v396, %v446
    %v448 = vrot.slane %v440, %v447
    %v449 = vsel %vm405, %v448, %v444
    %v451 = vsel %vm408, %v449, 0.0
    %452 = vadd.xlane.f32.xlu0 %v451
    %v453 = vpop.xlane.xlu0 %452
    %v454 = vadd.f32 %v432, %v453
    %v457 = vmul.f32 %v437, %v385
    %v458 = vmul.f32 %v440, %v390
    %v459 = vrot.slane %v457, 4
    %v460 = vadd.f32 %v457, %v459
    %v461 = vrot.slane %v460, 2
    %v462 = vadd.f32 %v460, %v461
    %v463 = vrot.slane %v462, 1
    %v464 = vadd.f32 %v462, %v463
    %v465 = vrot.slane %v458, 4
    %v466 = vadd.f32 %v458, %v465
    %v467 = vrot.slane %v466, 2
    %v468 = vadd.f32 %v466, %v467
    %v469 = vrot.slane %v468, 1
    %v470 = vadd.f32 %v468, %v469
    %v473 = vsel %vm405, %v470, %v464
    %v475 = vadd.f32 %v432, %v473
    %v476 = vrcp.pop %v454
    %v477 = vmul.f32 %v475, %v476
    %v478 = vld [vmem:[%s5] sm:$0x1]
    %v480 = vlaneseq
    %v481 = vshrl.u32 %v480, 7
    %v482 = vsub.s32 0, %v481
    %v483 = vrot.slane %v478, %v482
    %v485 = vadd.f32 %v477, %v483
    %486 = vst [vmem:[#allocation8] sm:$0x3] %v485
    // Predicated region
    $region38: #{tpu_custom_call.1} parent=1 // pred_check
      _
    $region39: #{tpu_custom_call.1} parent=1 // pred_check_branch
      %488 = sbr.rel (0) target = $region41
    $region40: #{tpu_custom_call.1} parent=1 // pred_region
      %s490 = ssub.s32 32, 32
      %491 = vsyncadd [#allocation4], %s490
      %s493 = sshll.u32 [#allocation8], 4
      %s494 = int_to_ptr.vmem [resolvable:$true] %s493
      %496 = dma.vmem_to_hbm [thread:$0]  %s494, 32, %s6, [#allocation4]
    $region41: #{tpu_custom_call.1} parent=1 // pred_fallthru
      _
    // Predicated region
    $region42: #{tpu_custom_call.1} parent=1 // pred_check
      _
    $region43: #{tpu_custom_call.1} parent=1 // pred_check_branch
      %498 = sbr.rel (0) target = $region45
    $region44: #{tpu_custom_call.1} parent=1 // pred_region
      %499 = dma.done [#allocation4], 32
    $region45: #{tpu_custom_call.1} parent=1 // pred_fallthru
      _
    %500 = vsyncpa [#allocation3], 1
    %501 = vsyncpa [#allocation6], 1
    %502 = vsyncpa [#allocation4], 1

// kernel: tpu_custom_call.1
$region0: #{tpu_custom_call.1}
  #allocation0 [shape = 'u32[]', space=smem, size = 0x4, offset = 0x4, fixed_abs, tag = 'smem constant byte address 0x4 - core index']
  #allocation1 [shape = 'u32[144,128]{1,0:T(1,128)}', space=vmem, size = 0x12000, scoped, tag = 'internal scratch']
  %s0 = inlined_call_operand.hbm [shape: f32[2,8,32], index: 0, kind: input, shape index: {}]
  %s1 = inlined_call_operand.hbm [shape: f32[32,512], index: 1, kind: input, shape index: {}]
  %s2 = inlined_call_operand.vmem [shape: f32[1,512], index: 2, kind: input, shape index: {}]
  %s3 = inlined_call_operand.vmem [shape: f32[1,512], index: 3, kind: input, shape index: {}]
  %s4 = inlined_call_operand.hbm [shape: f32[32,128], index: 4, kind: input, shape index: {}]
  %s5 = inlined_call_operand.vmem [shape: f32[1,128], index: 5, kind: input, shape index: {}]
  %s6 = inlined_call_operand.hbm [shape: f32[2,128], index: 6, kind: output, shape index: {}]
  %s7 = sld [smem:[#allocation0]]
  $region46: #{tpu_custom_call.1} parent=0
    _
  %s9 = ssub.s32 1, %s7
  %s10 = scalar_select 0, %s9, %s7
  $region1: #{tpu_custom_call.1} parent=0
    #allocation2 [shape = 'u8[8192]{0}', space=vmem, size = 0x2000, scoped, tag = 'input window, operand 0, single buffered']
    #allocation3 [shape = 's32[1]{0}', space=sflag, size = 0x4, scoped, tag = 'scoped memory for tpu_custom_call.1']
    #allocation4 [shape = 's32[1]{0}', space=sflag, size = 0x4, scoped, tag = 'scoped memory for tpu_custom_call.1']
    #allocation5 [shape = 'u8[65536]{0}', space=vmem, size = 0x10000, scoped, tag = 'input window, operand 1, single buffered']
    #allocation6 [shape = 's32[1]{0}', space=sflag, size = 0x4, scoped, tag = 'scoped memory for tpu_custom_call.1']
    #allocation7 [shape = 'u8[16384]{0}', space=vmem, size = 0x4000, scoped, tag = 'input window, operand 4, single buffered']
    #allocation8 [shape = 'u8[1024]{0}', space=vmem, size = 0x400, scoped, tag = 'output window, operand 0, single buffered']
    %11 = vsyncpa [#allocation3], 0
    %12 = vsyncpa [#allocation6], 0
    %13 = vsyncpa [#allocation4], 0
    // Predicated region
    $region2: #{tpu_custom_call.1} parent=1 // pred_check
      _
    $region3: #{tpu_custom_call.1} parent=1 // pred_check_branch
      %15 = sbr.rel (0) target = $region5
    $region4: #{tpu_custom_call.1} parent=1 // pred_region
      %s17 = ssub.s32 256, 256
      %18 = vsyncadd [#allocation3], %s17
      %s19 = sshll.u32 [#allocation2], 4
      %s20 = int_to_ptr.vmem [resolvable:$true] %s19
      %25 = dma.hbm_to_vmem [thread:$0]  %s0, 256, %s20, [#allocation3], 128, 128, 8
    $region5: #{tpu_custom_call.1} parent=1 // pred_fallthru
      _
    // Predicated region
    $region6: #{tpu_custom_call.1} parent=1 // pred_check
      _
    $region7: #{tpu_custom_call.1} parent=1 // pred_check_branch
      %27 = sbr.rel (0) target = $region9
    $region8: #{tpu_custom_call.1} parent=1 // pred_region
      %s29 = ssub.s32 2048, 2048
      %30 = vsyncadd [#allocation6], %s29
      %s31 = sshll.u32 [#allocation5], 4
      %s32 = int_to_ptr.vmem [resolvable:$true] %s31
      %37 = dma.hbm_to_vmem [thread:$0]  %s1, 2048, %s32, [#allocation6], 512, 512, 32
    $region9: #{tpu_custom_call.1} parent=1 // pred_fallthru
      _
    // Predicated region
    $region10: #{tpu_custom_call.1} parent=1 // pred_check
      _
    $region11: #{tpu_custom_call.1} parent=1 // pred_check_branch
      %39 = sbr.rel (0) target = $region13
    $region12: #{tpu_custom_call.1} parent=1 // pred_region
      _
    $region13: #{tpu_custom_call.1} parent=1 // pred_fallthru
      _
    // Predicated region
    $region14: #{tpu_custom_call.1} parent=1 // pred_check
      _
    $region15: #{tpu_custom_call.1} parent=1 // pred_check_branch
      %41 = sbr.rel (0) target = $region17
    $region16: #{tpu_custom_call.1} parent=1 // pred_region
      _
    $region17: #{tpu_custom_call.1} parent=1 // pred_fallthru
      _
    // Predicated region
    $region18: #{tpu_custom_call.1} parent=1 // pred_check
      _
    $region19: #{tpu_custom_call.1} parent=1 // pred_check_branch
      %43 = sbr.rel (0) target = $region21
    $region20: #{tpu_custom_call.1} parent=1 // pred_region
      %s45 = ssub.s32 512, 512
      %46 = vsyncadd [#allocation6], %s45
      %s47 = sshll.u32 [#allocation7], 4
      %s48 = int_to_ptr.vmem [resolvable:$true] %s47
      %53 = dma.hbm_to_vmem [thread:$0]  %s4, 512, %s48, [#allocation6], 128, 128, 8
    $region21: #{tpu_custom_call.1} parent=1 // pred_fallthru
      _
    // Predicated region
    $region22: #{tpu_custom_call.1} parent=1 // pred_check
      _
    $region23: #{tpu_custom_call.1} parent=1 // pred_check_branch
      %55 = sbr.rel (0) target = $region25
    $region24: #{tpu_custom_call.1} parent=1 // pred_region
      _
    $region25: #{tpu_custom_call.1} parent=1 // pred_fallthru
      _
    // Predicated region
    $region26: #{tpu_custom_call.1} parent=1 // pred_check
      _
    $region27: #{tpu_custom_call.1} parent=1 // pred_check_branch
      %57 = sbr.rel (0) target = $region29
    $region28: #{tpu_custom_call.1} parent=1 // pred_region
      %58 = dma.done [#allocation3], 256
    $region29: #{tpu_custom_call.1} parent=1 // pred_fallthru
      _
    // Predicated region
    $region30: #{tpu_custom_call.1} parent=1 // pred_check
      _
    $region31: #{tpu_custom_call.1} parent=1 // pred_check_branch
      %60 = sbr.rel (0) target = $region33
    $region32: #{tpu_custom_call.1} parent=1 // pred_region
      %61 = dma.done [#allocation6], 2048
    $region33: #{tpu_custom_call.1} parent=1 // pred_fallthru
      _
    // Predicated region
    $region34: #{tpu_custom_call.1} parent=1 // pred_check
      _
    $region35: #{tpu_custom_call.1} parent=1 // pred_check_branch
      %63 = sbr.rel (0) target = $region37
    $region36: #{tpu_custom_call.1} parent=1 // pred_region
      %64 = dma.done [#allocation6], 512
    $region37: #{tpu_custom_call.1} parent=1 // pred_fallthru
      _
    %v65 = vld [vmem:[%s3] sm:$0xf]
    %v66 = vld [vmem:[%s2] sm:$0xf]
    %v67 = vld [vmem:[#allocation2] sm:$0xff]
    %v68 = vld [vmem:[#allocation2 + $0x8] sm:$0xff]
    %v69 = vld [vmem:[#allocation5] sm:$0xff]
    %v70 = vld [vmem:[#allocation5 + $0x8] sm:$0xff]
    %v71 = vld [vmem:[#allocation5 + $0x10] sm:$0xff]
    %v72 = vld [vmem:[#allocation5 + $0x18] sm:$0xff]
    %v73 = vld [vmem:[#allocation5 + $0x20] sm:$0xff]
    %v74 = vld [vmem:[#allocation5 + $0x28] sm:$0xff]
    %v75 = vld [vmem:[#allocation5 + $0x30] sm:$0xff]
    %v76 = vld [vmem:[#allocation5 + $0x38] sm:$0xff]
    %v77 = vld [vmem:[#allocation5 + $0x40] sm:$0xff]
    %v78 = vld [vmem:[#allocation5 + $0x48] sm:$0xff]
    %v79 = vld [vmem:[#allocation5 + $0x50] sm:$0xff]
    %v80 = vld [vmem:[#allocation5 + $0x58] sm:$0xff]
    %v81 = vld [vmem:[#allocation5 + $0x60] sm:$0xff]
    %v82 = vld [vmem:[#allocation5 + $0x68] sm:$0xff]
    %v83 = vld [vmem:[#allocation5 + $0x70] sm:$0xff]
    %v84 = vld [vmem:[#allocation5 + $0x78] sm:$0xff]
    %v86 = vlaneseq
    %v87 = vshrl.u32 %v86, 7
    %v88 = vsub.s32 0, %v87
    %v89 = vrot.slane %v66, %v88
    %v90 = vlaneseq
    %v91 = vshrl.u32 %v90, 7
    %v92 = vsub.s32 1, %v91
    %v93 = vrot.slane %v66, %v92
    %v94 = vlaneseq
    %v95 = vshrl.u32 %v94, 7
    %v96 = vsub.s32 2, %v95
    %v97 = vrot.slane %v66, %v96
    %v98 = vlaneseq
    %v99 = vshrl.u32 %v98, 7
    %v100 = vsub.s32 3, %v99
    %v101 = vrot.slane %v66, %v100
    %vm106 = vcmask 261120
    %v108 = vsel %vm106, %v67, 0
    %v111 = vsel %vm106, %v68, 0
    %113 = vmatprep.subr.mxu0 %v70
    %114 = vmatpush1.msra.mxu0 %v69
    %115 = vmatprep.subr.mxu0 %v74
    %116 = vmatpush1.msra.mxu0 %v73
    %117 = vmatprep.subr.mxu0 %v78
    %118 = vmatpush1.msra.mxu0 %v77
    %119 = vmatprep.subr.mxu0 %v82
    %120 = vmatpush1.msra.mxu0 %v81
    %121 = vmatprep.subr.mxu0 0.0
    %122 = vmatpush1.msra.mxu0 0.0
    %123 = vmatprep.subr.mxu0 0.0
    %124 = vmatpush1.msra.mxu0 0.0
    %125 = vmatprep.subr.mxu0 0.0
    %126 = vmatpush1.msra.mxu0 0.0
    %127 = vmatprep.subr.mxu0 0.0
    %128 = vmatpush1.msra.mxu0 0.0
    %129 = vmatprep.subr.mxu0 0.0
    %130 = vmatpush1.msra.mxu0 0.0
    %131 = vmatprep.subr.mxu0 0.0
    %132 = vmatpush1.msra.mxu0 0.0
    %133 = vmatprep.subr.mxu0 0.0
    %134 = vmatpush1.msra.mxu0 0.0
    %135 = vmatprep.subr.mxu0 0.0
    %136 = vmatpush1.msra.mxu0 0.0
    %137 = vmatprep.subr.mxu0 0.0
    %138 = vmatpush1.msra.mxu0 0.0
    %139 = vmatprep.subr.mxu0 0.0
    %140 = vmatpush1.msra.mxu0 0.0
    %141 = vmatprep.subr.mxu0 0.0
    %142 = vmatpush1.msra.mxu0 0.0
    %143 = vmatprep.subr.mxu0 0.0
    %144 = vmatpush1.msra.mxu0 0.0
    %145 = vmatprep.subr.mxu0 0.0
    %146 = vmatpush1.msra.mxu0 0.0
    %147 = vmatprep.subr.mxu0 0.0
    %148 = vmatpush1.msra.mxu0 0.0
    %149 = vmatprep.subr.mxu0 0.0
    %150 = vmatpush1.msra.mxu0 0.0
    %151 = vmatprep.subr.mxu0 0.0
    %152 = vmatpush1.msra.mxu0 0.0
    %153 = vmatprep.subr.mxu0 0.0
    %154 = vmatpush1.msra.mxu0 0.0
    %155 = vmatprep.subr.mxu0 0.0
    %156 = vmatpush1.msra.mxu0 0.0
    %157 = vmatprep.subr.mxu0 0.0
    %158 = vmatpush1.msra.mxu0 0.0
    %159 = vmatprep.subr.mxu0 0.0
    %160 = vmatpush1.msra.mxu0 0.0
    %161 = vmatprep.subr.mxu0 0.0
    %162 = vmatpush1.msra.mxu0 0.0
    %163 = vmatprep.subr.mxu0 0.0
    %164 = vmatpush1.msra.mxu0 0.0
    %165 = vmatprep.subr.mxu0 0.0
    %166 = vmatpush1.msra.mxu0 0.0
    %167 = vmatprep.subr.mxu0 0.0
    %168 = vmatpush1.msra.mxu0 0.0
    %169 = vmatprep.subr.mxu0 0.0
    %170 = vmatpush1.msra.mxu0 0.0
    %171 = vmatprep.subr.mxu0 0.0
    %172 = vmatpush1.msra.mxu0 0.0
    %173 = vmatprep.subr.mxu0 0.0
    %174 = vmatpush1.msra.mxu0 0.0
    %175 = vmatprep.subr.mxu0 0.0
    %176 = vmatpush1.msra.mxu0 0.0
    %177 = vmatprep.mubr.f32.mxu0 0.0
    %178 = vmatmul.mubr.f32.gmra.mrb[0].mxu0 %v108
    %v179 = vpop.f32.mrb[0].mxu0
    %v180 = vadd.f32 %v89, %v179
    %v181 = vpop.f32.mrb[0].mxu0
    %v182 = vadd.f32 %v93, %v181
    %183 = vmatprep.mubr.f32.mxu0 0.0
    %184 = vmatmul.mubr.f32.gmra.mrb[0].mxu0 %v111
    %v185 = vpop.f32.mrb[0].mxu0
    %v186 = vadd.f32 %v89, %v185
    %v187 = vpop.f32.mrb[0].mxu0
    %v188 = vadd.f32 %v93, %v187
    %189 = vdwg.mxu0
    %190 = vmatprep.subr.mxu0 %v72
    %191 = vmatpush1.msra.mxu0 %v71
    %192 = vmatprep.subr.mxu0 %v76
    %193 = vmatpush1.msra.mxu0 %v75
    %194 = vmatprep.subr.mxu0 %v80
    %195 = vmatpush1.msra.mxu0 %v79
    %196 = vmatprep.subr.mxu0 %v84
    %197 = vmatpush1.msra.mxu0 %v83
    %198 = vmatprep.subr.mxu0 0.0
    %199 = vmatpush1.msra.mxu0 0.0
    %200 = vmatprep.subr.mxu0 0.0
    %201 = vmatpush1.msra.mxu0 0.0
    %202 = vmatprep.subr.mxu0 0.0
    %203 = vmatpush1.msra.mxu0 0.0
    %204 = vmatprep.subr.mxu0 0.0
    %205 = vmatpush1.msra.mxu0 0.0
    %206 = vmatprep.subr.mxu0 0.0
    %207 = vmatpush1.msra.mxu0 0.0
    %208 = vmatprep.subr.mxu0 0.0
    %209 = vmatpush1.msra.mxu0 0.0
    %210 = vmatprep.subr.mxu0 0.0
    %211 = vmatpush1.msra.mxu0 0.0
    %212 = vmatprep.subr.mxu0 0.0
    %213 = vmatpush1.msra.mxu0 0.0
    %214 = vmatprep.subr.mxu0 0.0
    %215 = vmatpush1.msra.mxu0 0.0
    %216 = vmatprep.subr.mxu0 0.0
    %217 = vmatpush1.msra.mxu0 0.0
    %218 = vmatprep.subr.mxu0 0.0
    %219 = vmatpush1.msra.mxu0 0.0
    %220 = vmatprep.subr.mxu0 0.0
    %221 = vmatpush1.msra.mxu0 0.0
    %222 = vmatprep.subr.mxu0 0.0
    %223 = vmatpush1.msra.mxu0 0.0
    %224 = vmatprep.subr.mxu0 0.0
    %225 = vmatpush1.msra.mxu0 0.0
    %226 = vmatprep.subr.mxu0 0.0
    %227 = vmatpush1.msra.mxu0 0.0
    %228 = vmatprep.subr.mxu0 0.0
    %229 = vmatpush1.msra.mxu0 0.0
    %230 = vmatprep.subr.mxu0 0.0
    %231 = vmatpush1.msra.mxu0 0.0
    %232 = vmatprep.subr.mxu0 0.0
    %233 = vmatpush1.msra.mxu0 0.0
    %234 = vmatprep.subr.mxu0 0.0
    %235 = vmatpush1.msra.mxu0 0.0
    %236 = vmatprep.subr.mxu0 0.0
    %237 = vmatpush1.msra.mxu0 0.0
    %238 = vmatprep.subr.mxu0 0.0
    %239 = vmatpush1.msra.mxu0 0.0
    %240 = vmatprep.subr.mxu0 0.0
    %241 = vmatpush1.msra.mxu0 0.0
    %242 = vmatprep.subr.mxu0 0.0
    %243 = vmatpush1.msra.mxu0 0.0
    %244 = vmatprep.subr.mxu0 0.0
    %245 = vmatpush1.msra.mxu0 0.0
    %246 = vmatprep.subr.mxu0 0.0
    %247 = vmatpush1.msra.mxu0 0.0
    %248 = vmatprep.subr.mxu0 0.0
    %249 = vmatpush1.msra.mxu0 0.0
    %250 = vmatprep.subr.mxu0 0.0
    %251 = vmatpush1.msra.mxu0 0.0
    %252 = vmatprep.subr.mxu0 0.0
    %253 = vmatpush1.msra.mxu0 0.0
    %254 = vmatprep.mubr.f32.mxu0 0.0
    %255 = vmatmul.mubr.f32.gmra.mrb[0].mxu0 %v108
    %v256 = vpop.f32.mrb[0].mxu0
    %v257 = vadd.f32 %v97, %v256
    %v258 = vpop.f32.mrb[0].mxu0
    %v259 = vadd.f32 %v101, %v258
    %260 = vmatprep.mubr.f32.mxu0 0.0
    %261 = vmatmul.mubr.f32.gmra.mrb[0].mxu0 %v111
    %v262 = vpop.f32.mrb[0].mxu0
    %v263 = vadd.f32 %v97, %v262
    %v264 = vpop.f32.mrb[0].mxu0
    %v265 = vadd.f32 %v101, %v264
    %266 = vdwg.mxu0
    %v267 = vtanh.pop %v180
    %v268 = vtanh.pop %v182
    %v269 = vtanh.pop %v257
    %v270 = vtanh.pop %v259
    %v271 = vtanh.pop %v186
    %v272 = vtanh.pop %v188
    %v273 = vtanh.pop %v263
    %v274 = vtanh.pop %v265
    %v276 = vlaneseq
    %v277 = vshrl.u32 %v276, 7
    %v278 = vsub.s32 0, %v277
    %v279 = vrot.slane %v65, %v278
    %v280 = vlaneseq
    %v281 = vshrl.u32 %v280, 7
    %v282 = vsub.s32 1, %v281
    %v283 = vrot.slane %v65, %v282
    %v284 = vlaneseq
    %v285 = vshrl.u32 %v284, 7
    %v286 = vsub.s32 2, %v285
    %v287 = vrot.slane %v65, %v286
    %v288 = vlaneseq
    %v289 = vshrl.u32 %v288, 7
    %v290 = vsub.s32 3, %v289
    %v291 = vrot.slane %v65, %v290
    %v296 = vmul.f32 %v267, %v279
    %v297 = vmul.f32 %v268, %v283
    %v298 = vmul.f32 %v269, %v287
    %v299 = vmul.f32 %v270, %v291
    %v300 = vmul.f32 %v271, %v279
    %v301 = vmul.f32 %v272, %v283
    %v302 = vmul.f32 %v273, %v287
    %v303 = vmul.f32 %v274, %v291
    %v304 = vadd.f32 %v296, %v297
    %v305 = vadd.f32 %v304, %v298
    %v306 = vadd.f32 %v305, %v299
    %307 = vadd.xlane.f32.xlu0 %v306
    %v308 = vpop.xlane.xlu0 %307
    %v309 = vadd.f32 %v300, %v301
    %v310 = vadd.f32 %v309, %v302
    %v311 = vadd.f32 %v310, %v303
    %312 = vadd.xlane.f32.xlu0 %v311
    %v313 = vpop.xlane.xlu0 %312
    %v314 = vld [vmem:[#allocation7] sm:$0xff]
    %v315 = vld [vmem:[#allocation7 + $0x8] sm:$0xff]
    %v316 = vld [vmem:[#allocation7 + $0x10] sm:$0xff]
    %v317 = vld [vmem:[#allocation7 + $0x18] sm:$0xff]
    %318 = vmatprep.subr.mxu0 0.0
    %319 = vmatpush1.msra.mxu0 %v314
    %320 = vmatprep.subr.mxu0 0.0
    %321 = vmatpush1.msra.mxu0 %v315
    %322 = vmatprep.subr.mxu0 0.0
    %323 = vmatpush1.msra.mxu0 %v316
    %324 = vmatprep.subr.mxu0 0.0
    %325 = vmatpush1.msra.mxu0 %v317
    %326 = vmatprep.subr.mxu0 0.0
    %327 = vmatpush1.msra.mxu0 0.0
    %328 = vmatprep.subr.mxu0 0.0
    %329 = vmatpush1.msra.mxu0 0.0
    %330 = vmatprep.subr.mxu0 0.0
    %331 = vmatpush1.msra.mxu0 0.0
    %332 = vmatprep.subr.mxu0 0.0
    %333 = vmatpush1.msra.mxu0 0.0
    %334 = vmatprep.subr.mxu0 0.0
    %335 = vmatpush1.msra.mxu0 0.0
    %336 = vmatprep.subr.mxu0 0.0
    %337 = vmatpush1.msra.mxu0 0.0
    %338 = vmatprep.subr.mxu0 0.0
    %339 = vmatpush1.msra.mxu0 0.0
    %340 = vmatprep.subr.mxu0 0.0
    %341 = vmatpush1.msra.mxu0 0.0
    %342 = vmatprep.subr.mxu0 0.0
    %343 = vmatpush1.msra.mxu0 0.0
    %344 = vmatprep.subr.mxu0 0.0
    %345 = vmatpush1.msra.mxu0 0.0
    %346 = vmatprep.subr.mxu0 0.0
    %347 = vmatpush1.msra.mxu0 0.0
    %348 = vmatprep.subr.mxu0 0.0
    %349 = vmatpush1.msra.mxu0 0.0
    %350 = vmatprep.subr.mxu0 0.0
    %351 = vmatpush1.msra.mxu0 0.0
    %352 = vmatprep.subr.mxu0 0.0
    %353 = vmatpush1.msra.mxu0 0.0
    %354 = vmatprep.subr.mxu0 0.0
    %355 = vmatpush1.msra.mxu0 0.0
    %356 = vmatprep.subr.mxu0 0.0
    %357 = vmatpush1.msra.mxu0 0.0
    %358 = vmatprep.subr.mxu0 0.0
    %359 = vmatpush1.msra.mxu0 0.0
    %360 = vmatprep.subr.mxu0 0.0
    %361 = vmatpush1.msra.mxu0 0.0
    %362 = vmatprep.subr.mxu0 0.0
    %363 = vmatpush1.msra.mxu0 0.0
    %364 = vmatprep.subr.mxu0 0.0
    %365 = vmatpush1.msra.mxu0 0.0
    %366 = vmatprep.subr.mxu0 0.0
    %367 = vmatpush1.msra.mxu0 0.0
    %368 = vmatprep.subr.mxu0 0.0
    %369 = vmatpush1.msra.mxu0 0.0
    %370 = vmatprep.subr.mxu0 0.0
    %371 = vmatpush1.msra.mxu0 0.0
    %372 = vmatprep.subr.mxu0 0.0
    %373 = vmatpush1.msra.mxu0 0.0
    %374 = vmatprep.subr.mxu0 0.0
    %375 = vmatpush1.msra.mxu0 0.0
    %376 = vmatprep.subr.mxu0 0.0
    %377 = vmatpush1.msra.mxu0 0.0
    %378 = vmatprep.subr.mxu0 0.0
    %379 = vmatpush1.msra.mxu0 0.0
    %380 = vmatprep.subr.mxu0 0.0
    %381 = vmatpush1.msra.mxu0 0.0
    %382 = vmatprep.mubr.f32.mxu0 0.0
    %383 = vmatmul.mubr.f32.gmra.mrb[0].mxu0 %v108
    %v384 = vpop.f32.mrb[0].mxu0
    %v385 = vadd.f32 0.0, %v384
    %v386 = vpop.f32.mrb[0].mxu0
    %387 = vmatprep.mubr.f32.mxu0 0.0
    %388 = vmatmul.mubr.f32.gmra.mrb[0].mxu0 %v111
    %v389 = vpop.f32.mrb[0].mxu0
    %v390 = vadd.f32 0.0, %v389
    %v391 = vpop.f32.mrb[0].mxu0
    %392 = vdwg.mxu0
    %v395 = vlaneseq
    %v396 = vand.u32 %v395, 127
    %v397 = vlaneseq
    %v398 = vshrl.u32 %v397, 7
    %v399 = vsub.s32 %v396, %v398
    %v400 = vrot.slane %v308, %v399
    %v401 = vlaneseq
    %v402 = vshrl.u32 %v401, 7
    %v403 = vsub.s32 %v396, %v402
    %v404 = vrot.slane %v313, %v403
    %vm405 = vcmask 1041409
    %v406 = vsel %vm405, %v404, %v400
    %vm408 = vcmask 58368
    %v409 = vsel %vm408, %v406, -inf
    %410 = vmax.xlane.f32.xlu0 %v409
    %v411 = vpop.xlane.xlu0 %410
    %v412 = vsub.f32 -inf, %v411
    %v413 = vmul.f32 %v412, 1.442695
    %v414 = vpow.pop %v413
    %v416 = vlaneseq
    %v417 = vshrl.u32 %v416, 7
    %v418 = vsub.s32 0, %v417
    %v419 = vrot.slane %v411, %v418
    %v420 = vlaneseq
    %v421 = vshrl.u32 %v420, 7
    %v422 = vsub.s32 1, %v421
    %v423 = vrot.slane %v411, %v422
    %v426 = vsub.f32 %v308, %v419
    %v427 = vsub.f32 %v313, %v423
    %v428 = vmul.f32 %v426, 1.442695
    %v429 = vpow.pop %v428
    %v430 = vmul.f32 %v427, 1.442695
    %v431 = vpow.pop %v430
    %v432 = vmul.f32 %v414, 0.0
    %435 = vset.pattern.permute.xlu0 0
    %436 = vperm.xlu0 %435, %v429
    %v437 = vpop.permute.xlu0 %436
    %438 = vset.pattern.permute.xlu0 0
    %439 = vperm.xlu0 %438, %v431
    %v440 = vpop.permute.xlu0 %439
    %v441 = vlaneseq
    %v442 = vshrl.u32 %v441, 7
    %v443 = vsub.s32 %v396, %v442
    %v444 = vrot.slane %v437, %v443
    %v445 = vlaneseq
    %v446 = vshrl.u32 %v445, 7
    %v447 = vsub.s32 %v396, %v446
    %v448 = vrot.slane %v440, %v447
    %v449 = vsel %vm405, %v448, %v444
    %v451 = vsel %vm408, %v449, 0.0
    %452 = vadd.xlane.f32.xlu0 %v451
    %v453 = vpop.xlane.xlu0 %452
    %v454 = vadd.f32 %v432, %v453
    %v457 = vmul.f32 %v437, %v385
    %v458 = vmul.f32 %v440, %v390
    %v459 = vrot.slane %v457, 4
    %v460 = vadd.f32 %v457, %v459
    %v461 = vrot.slane %v460, 2
    %v462 = vadd.f32 %v460, %v461
    %v463 = vrot.slane %v462, 1
    %v464 = vadd.f32 %v462, %v463
    %v465 = vrot.slane %v458, 4
    %v466 = vadd.f32 %v458, %v465
    %v467 = vrot.slane %v466, 2
    %v468 = vadd.f32 %v466, %v467
    %v469 = vrot.slane %v468, 1
    %v470 = vadd.f32 %v468, %v469
    %v473 = vsel %vm405, %v470, %v464
    %v475 = vadd.f32 %v432, %v473
    %v476 = vrcp.pop %v454
    %v477 = vmul.f32 %v475, %v476
    %v478 = vld [vmem:[%s5] sm:$0x1]
    %v480 = vlaneseq
    %v481 = vshrl.u32 %v480, 7
    %v482 = vsub.s32 0, %v481
    %v483 = vrot.slane %v478, %v482
    %v485 = vadd.f32 %v477, %v483
    %486 = vst [vmem:[#allocation8] sm:$0x3] %v485
    // Predicated region
    $region38: #{tpu_custom_call.1} parent=1 // pred_check
      _
    $region39: #{tpu_custom_call.1} parent=1 // pred_check_branch
      %488 = sbr.rel (0) target = $region41
    $region40: #{tpu_custom_call.1} parent=1 // pred_region
      %s490 = ssub.s32 32, 32
      %491 = vsyncadd [#allocation4], %s490
      %s493 = sshll.u32 [#allocation8], 4
      %s494 = int_to_ptr.vmem [resolvable:$true] %s493
      %496 = dma.vmem_to_hbm [thread:$0]  %s494, 32, %s6, [#allocation4]
    $region41: #{tpu_custom_call.1} parent=1 // pred_fallthru
      _
    // Predicated region
    $region42: #{tpu_custom_call.1} parent=1 // pred_check
      _
    $region43: #{tpu_custom_call.1} parent=1 // pred_check_branch
      %498 = sbr.rel (0) target = $region45
    $region44: #{tpu_custom_call.1} parent=1 // pred_region
      %499 = dma.done [#allocation4], 32
    $region45: #{tpu_custom_call.1} parent=1 // pred_fallthru
      _
    %500 = vsyncpa [#allocation3], 1
    %501 = vsyncpa [#allocation6], 1
    %502 = vsyncpa [#allocation4], 1

</llo_original>
